<compile_context>
chip_gen: v6e
topology: v6e:2x2x1
jax: 0.10.0
libtpu: 0.0.40
codegen_flags: <defaults>
</compile_context>

<pallas_src>
import jax
import jax.numpy as jnp
from jax.experimental import pallas as pl
from jax.experimental.pallas import tpu as pltpu

K = 5      # Conv1d kernel size ('K5')
P = 2      # MaxPool1d kernel/stride ('P2')
LANE = 128


# ------------------------------ Pallas kernel --------------------------------

def _pool2(y, nb, t_out, h):
    """MaxPool1d(kernel=2, stride=2, ceil_mode=False) over time.
    y: (nb*t_out, h), rows ordered (b, t).  Returns (nb*t_pool, h)."""
    t_pool = t_out // P
    y3 = y.reshape(nb, t_out, h)[:, :P * t_pool, :].reshape(nb * t_pool, P, h)
    # even/odd maximum: no reshape-split + middle-axis reduce, minor (lane) dim intact.
    return jnp.maximum(y3[:, 0, :], y3[:, 1, :])


def tconv_fused_kernel(xcol_ref, w1_ref, s1_ref, sh1_ref, w2_ref, s2_ref, sh2_ref,
                       wfc_ref, bfc_ref, vf_ref, lg_ref):
    # xcol_ref: (nb, T1out, K*C)  layer-1 im2col (pre-built in wrapper), matmul dtype
    # w1_ref:(K*C,H)  w2_ref:(K*H,H)  wfc_ref:(H,Npad)   -- matmul dtype (bf16)
    # s*/sh*/bfc: f32 (1, .)   folded BN(eval)+bias scale/shift, FC bias
    # vf_ref: (nb, T2p, H) f32 ;  lg_ref: (nb, T2p, Npad) f32 (lane-dense)
    nb, t1_out, kc = xcol_ref.shape
    h = w1_ref.shape[1]
    n_pad = wfc_ref.shape[1]
    t1_p = t1_out // P
    t2_out = t1_p - K + 1
    t2_p = t2_out // P
    f32 = jnp.float32
    mm_dtype = w1_ref.dtype

    # ---- layer 1: Conv1d(K5) as ONE batched im2col matmul + folded BN + ReLU ----
    lhs1 = xcol_ref[...].reshape(nb * t1_out, kc)
    y1 = jnp.dot(lhs1, w1_ref[...], preferred_element_type=f32)      # (nb*T1out, H)
    y1 = jnp.maximum(y1 * s1_ref[...] + sh1_ref[...], 0.0)           # BN(eval)+bias+ReLU
    p1 = _pool2(y1, nb, t1_out, h)                                   # (nb*T1p, H)

    # ---- layer 2: im2col (lane-concat K shifted time slices), ONE batched matmul ----
    p1_3d = p1.reshape(nb, t1_p, h)
    lhs2 = jnp.concatenate([p1_3d[:, k:k + t2_out, :] for k in range(K)], axis=-1)
    lhs2 = lhs2.reshape(nb * t2_out, K * h).astype(mm_dtype)
    y2 = jnp.dot(lhs2, w2_ref[...], preferred_element_type=f32)      # (nb*T2out, H)
    y2 = jnp.maximum(y2 * s2_ref[...] + sh2_ref[...], 0.0)
    h2 = _pool2(y2, nb, t2_out, h)                                   # (nb*T2p, H)

    # ---- FC over the lane-padded class dim: ONE matmul, lane-dense store ----
    logits = jnp.dot(h2.astype(mm_dtype), wfc_ref[...],
                     preferred_element_type=f32) + bfc_ref[...]      # (nb*T2p, Npad)

    vf_ref[...] = h2.reshape(nb, t2_p, h).astype(vf_ref.dtype)
    lg_ref[...] = logits.reshape(nb, t2_p, n_pad).astype(lg_ref.dtype)


# --------------------------------- wrapper ------------------------------------

def temporal_conv_pallas(x_btc, w1, s1, sh1, w2, s2, sh2, wfc_pad, bfc_pad,
                         *, batch_tile=None, matmul_dtype=jnp.bfloat16):
    B, T, C = x_btc.shape
    H = w1.shape[1]
    Npad = wfc_pad.shape[1]
    T1out = T - K + 1
    T1p = T1out // P
    T2out = T1p - K + 1
    T2p = T2out // P

    if batch_tile is None:
        # >=2 grid points when B>=2 (uses both v7x TensorCores) while keeping each grid
        # step's matmul M = batch_tile*T1out rows large at production B.
        batch_tile = max(1, min(8, B // 2))
    assert B % batch_tile == 0, "pad the batch so batch_tile divides it"
    nb = batch_tile
    grid = (B // nb,)

    # Layer-1 im2col built here with XLA: the kernel's lhs becomes one contiguous,
    # lane-aligned (nb, T1out, K*C) slab (no in-kernel concat of 4-lane pieces).
    xcol = jnp.concatenate([x_btc[:, k:k + T1out, :] for k in range(K)], axis=-1)
    xcol = xcol.astype(matmul_dtype)
    w1 = w1.astype(matmul_dtype)
    w2 = w2.astype(matmul_dtype)
    wfc_pad = wfc_pad.astype(matmul_dtype)
    KC = xcol.shape[-1]

    # Explicit VMEM budget (v7x: 64 MiB physical; v5e scoped default is only 16 MiB):
    # double-buffered I/O tiles + resident weight slabs, with 4x headroom.
    bpe = jnp.dtype(matmul_dtype).itemsize
    io_bytes = 2 * (nb * T1out * KC * bpe + nb * T2p * (H + Npad) * 4)
    w_bytes = (KC * H + K * H * H + H * Npad) * bpe + (4 * H + Npad) * 4
    vmem_limit = int(min(64 * 2**20, max(4 * (io_bytes + w_bytes), 16 * 2**20)))

    vf, lg = pl.pallas_call(
        tconv_fused_kernel,
        out_shape=(jax.ShapeDtypeStruct((B, T2p, H), jnp.float32),
                   jax.ShapeDtypeStruct((B, T2p, Npad), jnp.float32)),
        grid=grid,
        in_specs=[
            pl.BlockSpec((nb, T1out, KC), lambda i: (i, 0, 0)),
            pl.BlockSpec(w1.shape, lambda i: (0, 0)),
            pl.BlockSpec(s1.shape, lambda i: (0, 0)),
            pl.BlockSpec(sh1.shape, lambda i: (0, 0)),
            pl.BlockSpec(w2.shape, lambda i: (0, 0)),
            pl.BlockSpec(s2.shape, lambda i: (0, 0)),
            pl.BlockSpec(sh2.shape, lambda i: (0, 0)),
            pl.BlockSpec(wfc_pad.shape, lambda i: (0, 0)),
            pl.BlockSpec(bfc_pad.shape, lambda i: (0, 0)),
        ],
        out_specs=(
            pl.BlockSpec((nb, T2p, H), lambda i: (i, 0, 0)),
            pl.BlockSpec((nb, T2p, Npad), lambda i: (i, 0, 0)),
        ),
        compiler_params=pltpu.CompilerParams(
            dimension_semantics=("parallel",),       # shard batch tiles across TCs (v7x)
            vmem_limit_bytes=vmem_limit),
    )(xcol, w1, s1, sh1, w2, s2, sh2, wfc_pad, bfc_pad)
    return vf, lg    # (B, T2p, H), (B, T2p, Npad)


# -------------------------- params & forward glue -----------------------------

def init_params(key, input_size, hidden_size, num_classes):
    ks = jax.random.split(key, 6)

    def conv_init(kw, kb, cin):
        bound = 1.0 / (cin * K) ** 0.5
        w = jax.random.uniform(kw, (hidden_size, cin, K), jnp.float32, -bound, bound)
        b = jax.random.uniform(kb, (hidden_size,), jnp.float32, -bound, bound)
        return w, b

    w1, b1 = conv_init(ks[0], ks[1], input_size)
    w2, b2 = conv_init(ks[2], ks[3], hidden_size)
    bound_fc = 1.0 / hidden_size ** 0.5
    wfc = jax.random.uniform(ks[4], (num_classes, hidden_size), jnp.float32, -bound_fc, bound_fc)
    bfc = jax.random.uniform(ks[5], (num_classes,), jnp.float32, -bound_fc, bound_fc)
    bn = dict(gamma=jnp.ones((hidden_size,), jnp.float32),
              beta=jnp.zeros((hidden_size,), jnp.float32),
              mean=jnp.zeros((hidden_size,), jnp.float32),
              var=jnp.ones((hidden_size,), jnp.float32))
    return dict(w1=w1, b1=b1, bn1=bn, w2=w2, b2=b2, bn2=bn, wfc=wfc, bfc=bfc)


def fold_conv_bn(w_torch, b_conv, bn, eps=1e-5):
    # TODO(synk): eval-mode BN only (running stats folded); training-mode batch statistics
    # over (B,T) are not computed.
    s = bn['gamma'] / jnp.sqrt(bn['var'] + eps)               # (H,)
    shift = s * (b_conv - bn['mean']) + bn['beta']            # (H,)
    H, C, Kk = w_torch.shape
    # (H, C, K) -> (K, C, H) -> (K*C, H): row index k*C + c matches the im2col lane order.
    w2d = jnp.transpose(w_torch, (2, 1, 0)).reshape(Kk * C, H)
    return w2d, s.reshape(1, -1), shift.reshape(1, -1)


def temporal_conv_forward(params, frame_feat, lgt, *, matmul_dtype=jnp.bfloat16,
                          batch_tile=None):
    # frame_feat: (B, C_in, T) (PyTorch NCW); lgt: (B,) sequence lengths
    x = jnp.transpose(frame_feat, (0, 2, 1))                  # (B, T, C) channels-last
    w1, s1, sh1 = fold_conv_bn(params['w1'], params['b1'], params['bn1'])
    w2, s2, sh2 = fold_conv_bn(params['w2'], params['b2'], params['bn2'])
    wfc = params['wfc'].T                                     # (H, N)
    bfc = params['bfc'].reshape(1, -1)                        # (1, N)
    N = wfc.shape[1]
    Npad = ((N + LANE - 1) // LANE) * LANE                    # lane-dense logits store
    wfc_pad = jnp.pad(wfc, ((0, 0), (0, Npad - N)))
    bfc_pad = jnp.pad(bfc, ((0, 0), (0, Npad - N)))

    vf, lg = temporal_conv_pallas(x, w1, s1, sh1, w2, s2, sh2, wfc_pad, bfc_pad,
                                  batch_tile=batch_tile, matmul_dtype=matmul_dtype)
    # final permute to torch .permute(2, 0, 1) layout: one XLA transpose of the small outputs
    visual_feat = jnp.transpose(vf, (1, 0, 2))                # (T', B, H)
    conv_logits = jnp.transpose(lg[:, :, :N], (1, 0, 2))      # (T', B, N)
    # update_lgt: K5(-4), P2(/2), K5(-4), P2(/2); torch.div is true division
    feat_len = ((lgt.astype(jnp.float32) - (K - 1)) / P - (K - 1)) / P
    return {
        'visual_feat': visual_feat,
        'conv_logits': conv_logits,
        'feat_len': feat_len,  # TODO(synk): torch .cpu() device transfer has no JAX equivalent
    }


# ----------------------------------- main --------------------------------------

if __name__ == "__main__":
    B, C_in, T = 2, 4, 32
    hidden, num_classes = 32, 10
    MM_DTYPE = jnp.bfloat16        # bf16 operands, f32 accumulation (v6e/v7x MXU)

    key = jax.random.PRNGKey(0)
    kx, kp = jax.random.split(key)
    frame_feat = jax.random.normal(kx, (B, C_in, T), jnp.float32)
    lgt = jnp.array([32.0, 30.0], jnp.float32)
    params = init_params(kp, C_in, hidden, num_classes)

    out = temporal_conv_forward(params, frame_feat, lgt, matmul_dtype=MM_DTYPE)
    out = jax.block_until_ready(out)

    # pure-JAX reference, mirroring the kernel's bf16-operand / f32-accumulate matmuls
    def ref_block(x, w2d, s, sh):
        Hh = w2d.shape[1]
        t_out = x.shape[1] - K + 1
        col = jnp.concatenate([x[:, k:k + t_out, :] for k in range(K)], axis=-1)
        y = jnp.einsum('btk,kh->bth', col.astype(MM_DTYPE), w2d.astype(MM_DTYPE),
                       preferred_element_type=jnp.float32)
        y = jnp.maximum(y * s + sh, 0.0)
        tp = t_out // P
        return jnp.max(y[:, :P * tp].reshape(x.shape[0], tp, P, Hh), axis=2)

    x0 = jnp.transpose(frame_feat, (0, 2, 1))
    w1, s1, sh1 = fold_conv_bn(params['w1'], params['b1'], params['bn1'])
    w2, s2, sh2 = fold_conv_bn(params['w2'], params['b2'], params['bn2'])
    vf_chk = ref_block(ref_block(x0, w1, s1, sh1), w2, s2, sh2)                   # (B, 5, H)
    log_chk = jnp.einsum('bth,hn->btn', vf_chk.astype(MM_DTYPE),
                         params['wfc'].T.astype(MM_DTYPE),
                         preferred_element_type=jnp.float32) + params['bfc']       # (B, 5, N)

    assert out['visual_feat'].shape == (5, B, hidden)
    assert out['conv_logits'].shape == (5, B, num_classes)
    assert jnp.allclose(out['visual_feat'], jnp.transpose(vf_chk, (1, 0, 2)),
                        atol=5e-3, rtol=5e-3)
    assert jnp.allclose(out['conv_logits'], jnp.transpose(log_chk, (1, 0, 2)),
                        atol=5e-3, rtol=5e-3)
    assert jnp.allclose(out['feat_len'], jnp.array([5.0, 4.5]))

    print("KERNEL_OK")
</pallas_src>

<mosaic_0001>
module attributes {stable_mosaic.version = 11 : i64} {
  func.func @tconv_fused_kernel(%arg0: i32, %arg1: memref<1x28x20xbf16, #tpu.memory_space<vmem>>, %arg2: memref<20x32xbf16, #tpu.memory_space<vmem>>, %arg3: memref<1x32xf32, #tpu.memory_space<vmem>>, %arg4: memref<1x32xf32, #tpu.memory_space<vmem>>, %arg5: memref<160x32xbf16, #tpu.memory_space<vmem>>, %arg6: memref<1x32xf32, #tpu.memory_space<vmem>>, %arg7: memref<1x32xf32, #tpu.memory_space<vmem>>, %arg8: memref<32x128xbf16, #tpu.memory_space<vmem>>, %arg9: memref<1x128xf32, #tpu.memory_space<vmem>>, %arg10: memref<1x5x32xf32, #tpu.memory_space<vmem>>, %arg11: memref<1x5x128xf32, #tpu.memory_space<vmem>>) attributes {dimension_semantics = [#tpu.dimension_semantics<parallel>], iteration_bounds = array<i64: 2>, scalar_prefetch = 0 : i64, scratch_operands = 0 : i64, tpu.core_type = #tpu.core_type<tc>, window_params = [{transform_indices = @transform_0, window_bounds = array<i64: 1, 28, 20>}, {pipeline_mode = #tpu.pipeline_mode<synchronous>, transform_indices = @transform_1, window_bounds = array<i64: 20, 32>}, {pipeline_mode = #tpu.pipeline_mode<synchronous>, transform_indices = @transform_2, window_bounds = array<i64: 1, 32>}, {pipeline_mode = #tpu.pipeline_mode<synchronous>, transform_indices = @transform_3, window_bounds = array<i64: 1, 32>}, {pipeline_mode = #tpu.pipeline_mode<synchronous>, transform_indices = @transform_4, window_bounds = array<i64: 160, 32>}, {pipeline_mode = #tpu.pipeline_mode<synchronous>, transform_indices = @transform_5, window_bounds = array<i64: 1, 32>}, {pipeline_mode = #tpu.pipeline_mode<synchronous>, transform_indices = @transform_6, window_bounds = array<i64: 1, 32>}, {pipeline_mode = #tpu.pipeline_mode<synchronous>, transform_indices = @transform_7, window_bounds = array<i64: 32, 128>}, {pipeline_mode = #tpu.pipeline_mode<synchronous>, transform_indices = @transform_8, window_bounds = array<i64: 1, 128>}, {transform_indices = @transform_9, window_bounds = array<i64: 1, 5, 32>}, {transform_indices = @transform_10, window_bounds = array<i64: 1, 5, 128>}]} {
    %c0 = arith.constant 0 : index
    %c0_0 = arith.constant 0 : index
    %c0_1 = arith.constant 0 : index
    %0 = vector.load %arg1[%c0, %c0_0, %c0_1] : memref<1x28x20xbf16, #tpu.memory_space<vmem>>, vector<1x28x20xbf16>
    %1 = vector.shape_cast %0 : vector<1x28x20xbf16> to vector<28x20xbf16>
    %c0_2 = arith.constant 0 : index
    %c0_3 = arith.constant 0 : index
    %2 = vector.load %arg2[%c0_2, %c0_3] : memref<20x32xbf16, #tpu.memory_space<vmem>>, vector<20x32xbf16>
    %cst = arith.constant dense<0.000000e+00> : vector<28x32xf32>
    %3 = tpu.matmul %1, %2, %cst {dimension_numbers = #tpu.dot_dimension_numbers<[1], [0], [0], [1], [0, 0, 1, 1], [], []>} : vector<28x20xbf16>, vector<20x32xbf16>, vector<28x32xf32> -> vector<28x32xf32>
    %c0_4 = arith.constant 0 : index
    %c0_5 = arith.constant 0 : index
    %4 = vector.load %arg3[%c0_4, %c0_5] : memref<1x32xf32, #tpu.memory_space<vmem>>, vector<1x32xf32>
    %5 = vector.broadcast %4 : vector<1x32xf32> to vector<28x32xf32>
    %6 = arith.mulf %3, %5 : vector<28x32xf32>
    %c0_6 = arith.constant 0 : index
    %c0_7 = arith.constant 0 : index
    %7 = vector.load %arg4[%c0_6, %c0_7] : memref<1x32xf32, #tpu.memory_space<vmem>>, vector<1x32xf32>
    %8 = vector.broadcast %7 : vector<1x32xf32> to vector<28x32xf32>
    %9 = arith.addf %6, %8 : vector<28x32xf32>
    %cst_8 = arith.constant 0.000000e+00 : f32
    %10 = vector.broadcast %cst_8 : f32 to vector<28x32xf32>
    %11 = arith.maximumf %9, %10 : vector<28x32xf32>
    %12 = vector.shape_cast %11 : vector<28x32xf32> to vector<1x28x32xf32>
    %13 = vector.shape_cast %12 : vector<1x28x32xf32> to vector<14x2x32xf32>
    %14 = vector.extract_strided_slice %13 {offsets = [0, 0, 0], sizes = [14, 1, 32], strides = [1, 1, 1]} : vector<14x2x32xf32> to vector<14x1x32xf32>
    %15 = vector.shape_cast %14 : vector<14x1x32xf32> to vector<14x32xf32>
    %16 = vector.extract_strided_slice %13 {offsets = [0, 1, 0], sizes = [14, 1, 32], strides = [1, 1, 1]} : vector<14x2x32xf32> to vector<14x1x32xf32>
    %17 = vector.shape_cast %16 : vector<14x1x32xf32> to vector<14x32xf32>
    %18 = arith.maximumf %15, %17 : vector<14x32xf32>
    %19 = vector.shape_cast %18 : vector<14x32xf32> to vector<1x14x32xf32>
    %20 = vector.extract_strided_slice %19 {offsets = [0, 0, 0], sizes = [1, 10, 32], strides = [1, 1, 1]} : vector<1x14x32xf32> to vector<1x10x32xf32>
    %21 = vector.extract_strided_slice %19 {offsets = [0, 1, 0], sizes = [1, 10, 32], strides = [1, 1, 1]} : vector<1x14x32xf32> to vector<1x10x32xf32>
    %22 = vector.extract_strided_slice %19 {offsets = [0, 2, 0], sizes = [1, 10, 32], strides = [1, 1, 1]} : vector<1x14x32xf32> to vector<1x10x32xf32>
    %23 = vector.extract_strided_slice %19 {offsets = [0, 3, 0], sizes = [1, 10, 32], strides = [1, 1, 1]} : vector<1x14x32xf32> to vector<1x10x32xf32>
    %24 = vector.extract_strided_slice %19 {offsets = [0, 4, 0], sizes = [1, 10, 32], strides = [1, 1, 1]} : vector<1x14x32xf32> to vector<1x10x32xf32>
    %25 = tpu.concatenate %20, %21, %22, %23, %24 in 2 : vector<1x10x32xf32>, vector<1x10x32xf32>, vector<1x10x32xf32>, vector<1x10x32xf32>, vector<1x10x32xf32> -> vector<1x10x160xf32>
    %26 = vector.shape_cast %25 : vector<1x10x160xf32> to vector<10x160xf32>
    %27 = arith.truncf %26 : vector<10x160xf32> to vector<10x160xbf16>
    %c0_9 = arith.constant 0 : index
    %c0_10 = arith.constant 0 : index
    %28 = vector.load %arg5[%c0_9, %c0_10] : memref<160x32xbf16, #tpu.memory_space<vmem>>, vector<160x32xbf16>
    %cst_11 = arith.constant dense<0.000000e+00> : vector<10x32xf32>
    %29 = tpu.matmul %27, %28, %cst_11 {dimension_numbers = #tpu.dot_dimension_numbers<[1], [0], [0], [1], [0, 0, 1, 1], [], []>} : vector<10x160xbf16>, vector<160x32xbf16>, vector<10x32xf32> -> vector<10x32xf32>
    %c0_12 = arith.constant 0 : index
    %c0_13 = arith.constant 0 : index
    %30 = vector.load %arg6[%c0_12, %c0_13] : memref<1x32xf32, #tpu.memory_space<vmem>>, vector<1x32xf32>
    %31 = vector.broadcast %30 : vector<1x32xf32> to vector<10x32xf32>
    %32 = arith.mulf %29, %31 : vector<10x32xf32>
    %c0_14 = arith.constant 0 : index
    %c0_15 = arith.constant 0 : index
    %33 = vector.load %arg7[%c0_14, %c0_15] : memref<1x32xf32, #tpu.memory_space<vmem>>, vector<1x32xf32>
    %34 = vector.broadcast %33 : vector<1x32xf32> to vector<10x32xf32>
    %35 = arith.addf %32, %34 : vector<10x32xf32>
    %cst_16 = arith.constant 0.000000e+00 : f32
    %36 = vector.broadcast %cst_16 : f32 to vector<10x32xf32>
    %37 = arith.maximumf %35, %36 : vector<10x32xf32>
    %38 = vector.shape_cast %37 : vector<10x32xf32> to vector<1x10x32xf32>
    %39 = vector.shape_cast %38 : vector<1x10x32xf32> to vector<5x2x32xf32>
    %40 = vector.extract_strided_slice %39 {offsets = [0, 0, 0], sizes = [5, 1, 32], strides = [1, 1, 1]} : vector<5x2x32xf32> to vector<5x1x32xf32>
    %41 = vector.shape_cast %40 : vector<5x1x32xf32> to vector<5x32xf32>
    %42 = vector.extract_strided_slice %39 {offsets = [0, 1, 0], sizes = [5, 1, 32], strides = [1, 1, 1]} : vector<5x2x32xf32> to vector<5x1x32xf32>
    %43 = vector.shape_cast %42 : vector<5x1x32xf32> to vector<5x32xf32>
    %44 = arith.maximumf %41, %43 : vector<5x32xf32>
    %45 = arith.truncf %44 : vector<5x32xf32> to vector<5x32xbf16>
    %c0_17 = arith.constant 0 : index
    %c0_18 = arith.constant 0 : index
    %46 = vector.load %arg8[%c0_17, %c0_18] : memref<32x128xbf16, #tpu.memory_space<vmem>>, vector<32x128xbf16>
    %cst_19 = arith.constant dense<0.000000e+00> : vector<5x128xf32>
    %47 = tpu.matmul %45, %46, %cst_19 {dimension_numbers = #tpu.dot_dimension_numbers<[1], [0], [0], [1], [0, 0, 1, 1], [], []>} : vector<5x32xbf16>, vector<32x128xbf16>, vector<5x128xf32> -> vector<5x128xf32>
    %c0_20 = arith.constant 0 : index
    %c0_21 = arith.constant 0 : index
    %48 = vector.load %arg9[%c0_20, %c0_21] : memref<1x128xf32, #tpu.memory_space<vmem>>, vector<1x128xf32>
    %49 = vector.broadcast %48 : vector<1x128xf32> to vector<5x128xf32>
    %50 = arith.addf %47, %49 : vector<5x128xf32>
    %51 = vector.shape_cast %44 : vector<5x32xf32> to vector<1x5x32xf32>
    %c0_22 = arith.constant 0 : index
    %c0_23 = arith.constant 0 : index
    %c0_24 = arith.constant 0 : index
    %52 = vector.load %arg10[%c0_22, %c0_23, %c0_24] : memref<1x5x32xf32, #tpu.memory_space<vmem>>, vector<1x5x32xf32>
    tpu.vector_store %arg10[%c0_22, %c0_23, %c0_24], %51 {strides = array<i32>} : memref<1x5x32xf32, #tpu.memory_space<vmem>>, vector<1x5x32xf32>,
    %53 = vector.shape_cast %50 : vector<5x128xf32> to vector<1x5x128xf32>
    %c0_25 = arith.constant 0 : index
    %c0_26 = arith.constant 0 : index
    %c0_27 = arith.constant 0 : index
    %54 = vector.load %arg11[%c0_25, %c0_26, %c0_27] : memref<1x5x128xf32, #tpu.memory_space<vmem>>, vector<1x5x128xf32>
    tpu.vector_store %arg11[%c0_25, %c0_26, %c0_27], %53 {strides = array<i32>} : memref<1x5x128xf32, #tpu.memory_space<vmem>>, vector<1x5x128xf32>,
    return
  }
  func.func @transform_0(%arg0: i32) -> (i32, i32, i32) {
    %c0_i32 = arith.constant 0 : i32
    %c0_i32_0 = arith.constant 0 : i32
    %c0_i32_1 = arith.constant 0 : i32
    return %arg0, %c0_i32, %c0_i32_0 : i32, i32, i32
  }
  func.func @transform_1(%arg0: i32) -> (i32, i32) {
    %c0_i32 = arith.constant 0 : i32
    %c0_i32_0 = arith.constant 0 : i32
    %c0_i32_1 = arith.constant 0 : i32
    return %c0_i32, %c0_i32_0 : i32, i32
  }
  func.func @transform_2(%arg0: i32) -> (i32, i32) {
    %c0_i32 = arith.constant 0 : i32
    %c0_i32_0 = arith.constant 0 : i32
    %c0_i32_1 = arith.constant 0 : i32
    return %c0_i32, %c0_i32_0 : i32, i32
  }
  func.func @transform_3(%arg0: i32) -> (i32, i32) {
    %c0_i32 = arith.constant 0 : i32
    %c0_i32_0 = arith.constant 0 : i32
    %c0_i32_1 = arith.constant 0 : i32
    return %c0_i32, %c0_i32_0 : i32, i32
  }
  func.func @transform_4(%arg0: i32) -> (i32, i32) {
    %c0_i32 = arith.constant 0 : i32
    %c0_i32_0 = arith.constant 0 : i32
    %c0_i32_1 = arith.constant 0 : i32
    return %c0_i32, %c0_i32_0 : i32, i32
  }
  func.func @transform_5(%arg0: i32) -> (i32, i32) {
    %c0_i32 = arith.constant 0 : i32
    %c0_i32_0 = arith.constant 0 : i32
    %c0_i32_1 = arith.constant 0 : i32
    return %c0_i32, %c0_i32_0 : i32, i32
  }
  func.func @transform_6(%arg0: i32) -> (i32, i32) {
    %c0_i32 = arith.constant 0 : i32
    %c0_i32_0 = arith.constant 0 : i32
    %c0_i32_1 = arith.constant 0 : i32
    return %c0_i32, %c0_i32_0 : i32, i32
  }
  func.func @transform_7(%arg0: i32) -> (i32, i32) {
    %c0_i32 = arith.constant 0 : i32
    %c0_i32_0 = arith.constant 0 : i32
    %c0_i32_1 = arith.constant 0 : i32
    return %c0_i32, %c0_i32_0 : i32, i32
  }
  func.func @transform_8(%arg0: i32) -> (i32, i32) {
    %c0_i32 = arith.constant 0 : i32
    %c0_i32_0 = arith.constant 0 : i32
    %c0_i32_1 = arith.constant 0 : i32
    return %c0_i32, %c0_i32_0 : i32, i32
  }
  func.func @transform_9(%arg0: i32) -> (i32, i32, i32) {
    %c0_i32 = arith.constant 0 : i32
    %c0_i32_0 = arith.constant 0 : i32
    %c0_i32_1 = arith.constant 0 : i32
    return %arg0, %c0_i32, %c0_i32_0 : i32, i32, i32
  }
  func.func @transform_10(%arg0: i32) -> (i32, i32, i32) {
    %c0_i32 = arith.constant 0 : i32
    %c0_i32_0 = arith.constant 0 : i32
    %c0_i32_1 = arith.constant 0 : i32
    return %arg0, %c0_i32, %c0_i32_0 : i32, i32, i32
  }
}

</mosaic_0001>

<llo_original>
// kernel: tpu_custom_call.1
$region0: #{tpu_custom_call.1}
  #allocation0 [shape = 'u32[]', space=smem, size = 0x4, offset = 0x4, fixed_abs, tag = 'smem constant byte address 0x4 - core index']
  #allocation1 [shape = 'u32[144,128]{1,0:T(1,128)}', space=vmem, size = 0x12000, scoped, tag = 'internal scratch']
  %s0 = inlined_call_operand.vmem [shape: bf16[2,28,20], index: 0, kind: input, shape index: {}]
  %s1 = inlined_call_operand.vmem [shape: bf16[20,32], index: 1, kind: input, shape index: {}]
  %s2 = inlined_call_operand.vmem [shape: f32[1,32], index: 2, kind: input, shape index: {}]
  %s3 = inlined_call_operand.vmem [shape: f32[1,32], index: 3, kind: input, shape index: {}]
  %s4 = inlined_call_operand.vmem [shape: bf16[160,32], index: 4, kind: input, shape index: {}]
  %s5 = inlined_call_operand.vmem [shape: f32[1,32], index: 5, kind: input, shape index: {}]
  %s6 = inlined_call_operand.vmem [shape: f32[1,32], index: 6, kind: input, shape index: {}]
  %s7 = inlined_call_operand.vmem [shape: bf16[32,128], index: 7, kind: input, shape index: {}]
  %s8 = inlined_call_operand.vmem [shape: f32[1,128], index: 8, kind: input, shape index: {}]
  %s9 = inlined_call_operand.vmem [shape: f32[2,5,32], index: 9, kind: output, shape index: {0}]
  %s10 = inlined_call_operand.vmem [shape: f32[2,5,128], index: 10, kind: output, shape index: {1}]
  %11 = xla_tuple %s9, %s10
  %s12 = sld [smem:[#allocation0]]
  $region77: #{tpu_custom_call.1} parent=0
    _
  %s14 = ssub.s32 1, %s12
  %s15 = scalar_select 0, %s14, %s12
  loop: start=0, step=1, limit=4
  $region2: #{tpu_custom_call.1} parent=0 // loop_pre_header
    _
  $region3: #{tpu_custom_call.1} parent=0 // loop_header
    %s17 = sphi 0, %s21
    %p18 = scmp.ge.s32.totalorder %s17, 4
    %s27 = sphi 0, %s29
    %s30 = sphi 0, %s27
    %s31 = sphi 0, %s30
    %s47 = sphi 0, %s31
    %s51 = sphi 0, %s51
    %s53 = sphi 0, %s51
    %s54 = sphi 0, %s53
    %s68 = sphi 0, %s54
    %s72 = sphi 0, %s72
    %s74 = sphi 0, %s72
    %s75 = sphi 0, %s74
    %s89 = sphi 0, %s75
    %s93 = sphi 0, %s93
    %s95 = sphi 0, %s93
    %s96 = sphi 0, %s95
    %s110 = sphi 0, %s96
    %s114 = sphi 0, %s114
    %s116 = sphi 0, %s114
    %s117 = sphi 0, %s116
    %s131 = sphi 0, %s117
    %s135 = sphi 0, %s135
    %s137 = sphi 0, %s135
    %s138 = sphi 0, %s137
    %s152 = sphi 0, %s138
    %s156 = sphi 0, %s156
    %s158 = sphi 0, %s156
    %s159 = sphi 0, %s158
    %s173 = sphi 0, %s159
    %s177 = sphi 0, %s177
    %s179 = sphi 0, %s177
    %s180 = sphi 0, %s179
    %s194 = sphi 0, %s180
    %s198 = sphi 0, %s198
    %s200 = sphi 0, %s198
    %s201 = sphi 0, %s200
    %s215 = sphi 0, %s201
    %s221 = sphi 0, %s223
    %s224 = sphi 0, %s221
    %s225 = sphi 0, %s224
    %s241 = sphi 0, %s225
    %s247 = sphi 0, %s249
    %s250 = sphi 0, %s247
    %s251 = sphi 0, %s250
    %s267 = sphi 0, %s251
  $region4: #{tpu_custom_call.1} parent=0 // loop_header_branch
    %20 = sbr.rel (%p18) target = $region8
  $region5: #{tpu_custom_call.1} parent=0 // loop_body
    %s22 = ssub.s32 %s17, 1
    %s23 = ssub.s32 %s17, 2
    %s24 = sadd.s32 %s17, 1
    %s25 = ssub.s32 %s17, %s24
    %p26 = scmp.eq.s32.totalorder %s25, 0
    %s28 = sadd.s32 %s27, 1
    %s29 = scalar_select %p26, %s27, %s28
    %p32 = pneg %p26
    %p33 = scmp.eq.s32.totalorder %s17, 1
    %p34 = por %p32, %p33
    %p35 = scmp.ne.s32.totalorder %s27, %s30
    %p36 = scmp.eq.s32.totalorder %s17, 0
    %p37 = por %p35, %p36
    %p38 = scmp.ne.s32.totalorder %s27, %s30
    %p39 = scmp.eq.s32.totalorder %s22, 1
    %p40 = por %p38, %p39
    %p41 = scmp.ne.s32.totalorder %s30, %s31
    %p42 = scmp.eq.s32.totalorder %s22, 0
    %p43 = por %p41, %p42
    %p44 = scmp.ne.s32.totalorder %s30, %s31
    %p45 = scmp.eq.s32.totalorder %s23, 1
    %p46 = por %p44, %p45
    %p48 = scmp.ne.s32.totalorder %s31, %s47
    %p49 = scmp.eq.s32.totalorder %s23, 0
    %p50 = por %p48, %p49
    %s52 = sadd.s32 %s51, 1
    %p55 = scmp.eq.s32.totalorder %s17, 1
    %p56 = scmp.ne.s32.totalorder %s51, %s53
    %p57 = scmp.eq.s32.totalorder %s17, 0
    %p58 = por %p56, %p57
    %p59 = scmp.ne.s32.totalorder %s51, %s53
    %p60 = scmp.eq.s32.totalorder %s22, 1
    %p61 = por %p59, %p60
    %p62 = scmp.ne.s32.totalorder %s53, %s54
    %p63 = scmp.eq.s32.totalorder %s22, 0
    %p64 = por %p62, %p63
    %p65 = scmp.ne.s32.totalorder %s53, %s54
    %p66 = scmp.eq.s32.totalorder %s23, 1
    %p67 = por %p65, %p66
    %p69 = scmp.ne.s32.totalorder %s54, %s68
    %p70 = scmp.eq.s32.totalorder %s23, 0
    %p71 = por %p69, %p70
    %s73 = sadd.s32 %s72, 1
    %p76 = scmp.eq.s32.totalorder %s17, 1
    %p77 = scmp.ne.s32.totalorder %s72, %s74
    %p78 = scmp.eq.s32.totalorder %s17, 0
    %p79 = por %p77, %p78
    %p80 = scmp.ne.s32.totalorder %s72, %s74
    %p81 = scmp.eq.s32.totalorder %s22, 1
    %p82 = por %p80, %p81
    %p83 = scmp.ne.s32.totalorder %s74, %s75
    %p84 = scmp.eq.s32.totalorder %s22, 0
    %p85 = por %p83, %p84
    %p86 = scmp.ne.s32.totalorder %s74, %s75
    %p87 = scmp.eq.s32.totalorder %s23, 1
    %p88 = por %p86, %p87
    %p90 = scmp.ne.s32.totalorder %s75, %s89
    %p91 = scmp.eq.s32.totalorder %s23, 0
    %p92 = por %p90, %p91
    %s94 = sadd.s32 %s93, 1
    %p97 = scmp.eq.s32.totalorder %s17, 1
    %p98 = scmp.ne.s32.totalorder %s93, %s95
    %p99 = scmp.eq.s32.totalorder %s17, 0
    %p100 = por %p98, %p99
    %p101 = scmp.ne.s32.totalorder %s93, %s95
    %p102 = scmp.eq.s32.totalorder %s22, 1
    %p103 = por %p101, %p102
    %p104 = scmp.ne.s32.totalorder %s95, %s96
    %p105 = scmp.eq.s32.totalorder %s22, 0
    %p106 = por %p104, %p105
    %p107 = scmp.ne.s32.totalorder %s95, %s96
    %p108 = scmp.eq.s32.totalorder %s23, 1
    %p109 = por %p107, %p108
    %p111 = scmp.ne.s32.totalorder %s96, %s110
    %p112 = scmp.eq.s32.totalorder %s23, 0
    %p113 = por %p111, %p112
    %s115 = sadd.s32 %s114, 1
    %p118 = scmp.eq.s32.totalorder %s17, 1
    %p119 = scmp.ne.s32.totalorder %s114, %s116
    %p120 = scmp.eq.s32.totalorder %s17, 0
    %p121 = por %p119, %p120
    %p122 = scmp.ne.s32.totalorder %s114, %s116
    %p123 = scmp.eq.s32.totalorder %s22, 1
    %p124 = por %p122, %p123
    %p125 = scmp.ne.s32.totalorder %s116, %s117
    %p126 = scmp.eq.s32.totalorder %s22, 0
    %p127 = por %p125, %p126
    %p128 = scmp.ne.s32.totalorder %s116, %s117
    %p129 = scmp.eq.s32.totalorder %s23, 1
    %p130 = por %p128, %p129
    %p132 = scmp.ne.s32.totalorder %s117, %s131
    %p133 = scmp.eq.s32.totalorder %s23, 0
    %p134 = por %p132, %p133
    %s136 = sadd.s32 %s135, 1
    %p139 = scmp.eq.s32.totalorder %s17, 1
    %p140 = scmp.ne.s32.totalorder %s135, %s137
    %p141 = scmp.eq.s32.totalorder %s17, 0
    %p142 = por %p140, %p141
    %p143 = scmp.ne.s32.totalorder %s135, %s137
    %p144 = scmp.eq.s32.totalorder %s22, 1
    %p145 = por %p143, %p144
    %p146 = scmp.ne.s32.totalorder %s137, %s138
    %p147 = scmp.eq.s32.totalorder %s22, 0
    %p148 = por %p146, %p147
    %p149 = scmp.ne.s32.totalorder %s137, %s138
    %p150 = scmp.eq.s32.totalorder %s23, 1
    %p151 = por %p149, %p150
    %p153 = scmp.ne.s32.totalorder %s138, %s152
    %p154 = scmp.eq.s32.totalorder %s23, 0
    %p155 = por %p153, %p154
    %s157 = sadd.s32 %s156, 1
    %p160 = scmp.eq.s32.totalorder %s17, 1
    %p161 = scmp.ne.s32.totalorder %s156, %s158
    %p162 = scmp.eq.s32.totalorder %s17, 0
    %p163 = por %p161, %p162
    %p164 = scmp.ne.s32.totalorder %s156, %s158
    %p165 = scmp.eq.s32.totalorder %s22, 1
    %p166 = por %p164, %p165
    %p167 = scmp.ne.s32.totalorder %s158, %s159
    %p168 = scmp.eq.s32.totalorder %s22, 0
    %p169 = por %p167, %p168
    %p170 = scmp.ne.s32.totalorder %s158, %s159
    %p171 = scmp.eq.s32.totalorder %s23, 1
    %p172 = por %p170, %p171
    %p174 = scmp.ne.s32.totalorder %s159, %s173
    %p175 = scmp.eq.s32.totalorder %s23, 0
    %p176 = por %p174, %p175
    %s178 = sadd.s32 %s177, 1
    %p181 = scmp.eq.s32.totalorder %s17, 1
    %p182 = scmp.ne.s32.totalorder %s177, %s179
    %p183 = scmp.eq.s32.totalorder %s17, 0
    %p184 = por %p182, %p183
    %p185 = scmp.ne.s32.totalorder %s177, %s179
    %p186 = scmp.eq.s32.totalorder %s22, 1
    %p187 = por %p185, %p186
    %p188 = scmp.ne.s32.totalorder %s179, %s180
    %p189 = scmp.eq.s32.totalorder %s22, 0
    %p190 = por %p188, %p189
    %p191 = scmp.ne.s32.totalorder %s179, %s180
    %p192 = scmp.eq.s32.totalorder %s23, 1
    %p193 = por %p191, %p192
    %p195 = scmp.ne.s32.totalorder %s180, %s194
    %p196 = scmp.eq.s32.totalorder %s23, 0
    %p197 = por %p195, %p196
    %s199 = sadd.s32 %s198, 1
    %p202 = scmp.eq.s32.totalorder %s17, 1
    %p203 = scmp.ne.s32.totalorder %s198, %s200
    %p204 = scmp.eq.s32.totalorder %s17, 0
    %p205 = por %p203, %p204
    %p206 = scmp.ne.s32.totalorder %s198, %s200
    %p207 = scmp.eq.s32.totalorder %s22, 1
    %p208 = por %p206, %p207
    %p209 = scmp.ne.s32.totalorder %s200, %s201
    %p210 = scmp.eq.s32.totalorder %s22, 0
    %p211 = por %p209, %p210
    %p212 = scmp.ne.s32.totalorder %s200, %s201
    %p213 = scmp.eq.s32.totalorder %s23, 1
    %p214 = por %p212, %p213
    %p216 = scmp.ne.s32.totalorder %s201, %s215
    %p217 = scmp.eq.s32.totalorder %s23, 0
    %p218 = por %p216, %p217
    %s219 = ssub.s32 %s17, %s24
    %p220 = scmp.eq.s32.totalorder %s219, 0
    %s222 = sadd.s32 %s221, 1
    %s223 = scalar_select %p220, %s221, %s222
    %p226 = pneg %p220
    %p227 = scmp.eq.s32.totalorder %s17, 1
    %p228 = por %p226, %p227
    %p229 = scmp.ne.s32.totalorder %s221, %s224
    %p230 = scmp.eq.s32.totalorder %s17, 0
    %p231 = por %p229, %p230
    %p232 = scmp.ne.s32.totalorder %s221, %s224
    %p233 = scmp.eq.s32.totalorder %s22, 1
    %p234 = por %p232, %p233
    %p235 = scmp.ne.s32.totalorder %s224, %s225
    %p236 = scmp.eq.s32.totalorder %s22, 0
    %p237 = por %p235, %p236
    %p238 = scmp.ne.s32.totalorder %s224, %s225
    %p239 = scmp.eq.s32.totalorder %s23, 1
    %p240 = por %p238, %p239
    %p242 = scmp.ne.s32.totalorder %s225, %s241
    %p243 = scmp.eq.s32.totalorder %s23, 0
    %p244 = por %p242, %p243
    %s245 = ssub.s32 %s17, %s24
    %p246 = scmp.eq.s32.totalorder %s245, 0
    %s248 = sadd.s32 %s247, 1
    %s249 = scalar_select %p246, %s247, %s248
    %p252 = pneg %p246
    %p253 = scmp.eq.s32.totalorder %s17, 1
    %p254 = por %p252, %p253
    %p255 = scmp.ne.s32.totalorder %s247, %s250
    %p256 = scmp.eq.s32.totalorder %s17, 0
    %p257 = por %p255, %p256
    %p258 = scmp.ne.s32.totalorder %s247, %s250
    %p259 = scmp.eq.s32.totalorder %s22, 1
    %p260 = por %p258, %p259
    %p261 = scmp.ne.s32.totalorder %s250, %s251
    %p262 = scmp.eq.s32.totalorder %s22, 0
    %p263 = por %p261, %p262
    %p264 = scmp.ne.s32.totalorder %s250, %s251
    %p265 = scmp.eq.s32.totalorder %s23, 1
    %p266 = por %p264, %p265
    %p268 = scmp.ne.s32.totalorder %s251, %s267
    %p269 = scmp.eq.s32.totalorder %s23, 0
    %p270 = por %p268, %p269
    %p271 = scmp.le.s32.totalorder 1, %s17
    %p272 = scmp.lt.s32.totalorder %s17, 3
    %p273 = pnand %p271, %p272
    %p274 = pneg %p273
    // Predicated region
    $region9: #{tpu_custom_call.1} parent=5 // pred_check
      _
    $region10: #{tpu_custom_call.1} parent=5 // pred_check_branch
      %276 = sbr.rel (%p273) target = $region12
    $region11: #{tpu_custom_call.1} parent=5 // pred_region
      %s277 = ssub.s32 %s17, 1
      // Predicated region
      $region13: #{tpu_custom_call.1} parent=11 // pred_check
        %p278 = pneg %p64
      $region14: #{tpu_custom_call.1} parent=11 // pred_check_branch
        %280 = sbr.rel (%p278) target = $region16
      $region15: #{tpu_custom_call.1} parent=11 // pred_region
        _
      $region16: #{tpu_custom_call.1} parent=11 // pred_fallthru
        _
      // Predicated region
      $region17: #{tpu_custom_call.1} parent=11 // pred_check
        %p281 = pneg %p85
      $region18: #{tpu_custom_call.1} parent=11 // pred_check_branch
        %283 = sbr.rel (%p281) target = $region20
      $region19: #{tpu_custom_call.1} parent=11 // pred_region
        _
      $region20: #{tpu_custom_call.1} parent=11 // pred_fallthru
        _
      // Predicated region
      $region21: #{tpu_custom_call.1} parent=11 // pred_check
        %p284 = pneg %p106
      $region22: #{tpu_custom_call.1} parent=11 // pred_check_branch
        %286 = sbr.rel (%p284) target = $region24
      $region23: #{tpu_custom_call.1} parent=11 // pred_region
        _
      $region24: #{tpu_custom_call.1} parent=11 // pred_fallthru
        _
      // Predicated region
      $region25: #{tpu_custom_call.1} parent=11 // pred_check
        %p287 = pneg %p127
      $region26: #{tpu_custom_call.1} parent=11 // pred_check_branch
        %289 = sbr.rel (%p287) target = $region28
      $region27: #{tpu_custom_call.1} parent=11 // pred_region
        _
      $region28: #{tpu_custom_call.1} parent=11 // pred_fallthru
        _
      // Predicated region
      $region29: #{tpu_custom_call.1} parent=11 // pred_check
        %p290 = pneg %p148
      $region30: #{tpu_custom_call.1} parent=11 // pred_check_branch
        %292 = sbr.rel (%p290) target = $region32
      $region31: #{tpu_custom_call.1} parent=11 // pred_region
        _
      $region32: #{tpu_custom_call.1} parent=11 // pred_fallthru
        _
      // Predicated region
      $region33: #{tpu_custom_call.1} parent=11 // pred_check
        %p293 = pneg %p169
      $region34: #{tpu_custom_call.1} parent=11 // pred_check_branch
        %295 = sbr.rel (%p293) target = $region36
      $region35: #{tpu_custom_call.1} parent=11 // pred_region
        _
      $region36: #{tpu_custom_call.1} parent=11 // pred_fallthru
        _
      // Predicated region
      $region37: #{tpu_custom_call.1} parent=11 // pred_check
        %p296 = pneg %p190
      $region38: #{tpu_custom_call.1} parent=11 // pred_check_branch
        %298 = sbr.rel (%p296) target = $region40
      $region39: #{tpu_custom_call.1} parent=11 // pred_region
        _
      $region40: #{tpu_custom_call.1} parent=11 // pred_fallthru
        _
      // Predicated region
      $region41: #{tpu_custom_call.1} parent=11 // pred_check
        %p299 = pneg %p211
      $region42: #{tpu_custom_call.1} parent=11 // pred_check_branch
        %301 = sbr.rel (%p299) target = $region44
      $region43: #{tpu_custom_call.1} parent=11 // pred_region
        _
      $region44: #{tpu_custom_call.1} parent=11 // pred_fallthru
        _
    $region12: #{tpu_custom_call.1} parent=5 // pred_fallthru
      _
    %p302 = scmp.lt.s32.totalorder %s17, 2
    // Predicated region
    $region45: #{tpu_custom_call.1} parent=5 // pred_check
      %p303 = pneg %p302
    $region46: #{tpu_custom_call.1} parent=5 // pred_check_branch
      %305 = sbr.rel (%p303) target = $region48
    $region47: #{tpu_custom_call.1} parent=5 // pred_region
      // Predicated region
      $region49: #{tpu_custom_call.1} parent=47 // pred_check
        %p306 = pneg %p37
      $region50: #{tpu_custom_call.1} parent=47 // pred_check_branch
        %308 = sbr.rel (%p306) target = $region52
      $region51: #{tpu_custom_call.1} parent=47 // pred_region
        %p309 = scmp.lt.s32.totalorder %s17, 1
        %s310 = scalar_select %p309, %s17, 1
        %s311 = smul.addr %s310, 4
        %s312 = smul.addr %s311, 4
        %s313 = scalar_lea.vmem %s0, %s312
      $region52: #{tpu_custom_call.1} parent=47 // pred_fallthru
        _
    $region48: #{tpu_custom_call.1} parent=5 // pred_fallthru
      _
    %p314 = scmp.le.s32.totalorder 1, %s17
    %p315 = scmp.lt.s32.totalorder %s17, 3
    %p316 = pnand %p314, %p315
    %p317 = pneg %p316
    // Predicated region
    $region53: #{tpu_custom_call.1} parent=5 // pred_check
      _
    $region54: #{tpu_custom_call.1} parent=5 // pred_check_branch
      %319 = sbr.rel (%p316) target = $region56
    $region55: #{tpu_custom_call.1} parent=5 // pred_region
      %s320 = ssub.s32 %s17, 1
      %p321 = scmp.lt.s32.totalorder %s22, 1
      %s322 = scalar_select %p321, %s22, 1
      %s323 = smul.addr %s322, 4
      %s324 = smul.addr %s323, 4
      %s325 = scalar_lea.vmem %s0, %s324
      %p326 = pneg %p43
      %p327 = pneg %p40
      %p328 = pneg %p64
      %p329 = pneg %p61
      %p330 = pneg %p85
      %p331 = pneg %p82
      %p332 = pneg %p106
      %p333 = pneg %p103
      %p334 = pneg %p127
      %p335 = pneg %p124
      %p336 = pneg %p148
      %p337 = pneg %p145
      %p338 = pneg %p169
      %p339 = pneg %p166
      %p340 = pneg %p190
      %p341 = pneg %p187
      %p342 = pneg %p211
      %p343 = pneg %p208
      %p344 = pneg %p237
      %p345 = pneg %p234
      %p346 = scmp.lt.s32.totalorder %s22, 1
      %s347 = scalar_select %p346, %s22, 1
      %s348 = smul.addr %s347, 8
      %s349 = scalar_lea.vmem %s9, %s348
      %p350 = pneg %p263
      %p351 = pneg %p260
      %p352 = scmp.lt.s32.totalorder %s22, 1
      %s353 = scalar_select %p352, %s22, 1
      %s354 = smul.addr %s353, 8
      %s355 = scalar_lea.vmem %s10, %s354
      %p356 = scmp.lt.s32.totalorder %s22, 1
      %s357 = scalar_select %p356, %s22, 1
      %s358 = smul.addr %s357, 4
      %s359 = smul.addr %s358, 4
      %s360 = scalar_lea.vmem %s0, %s359
      %p361 = scmp.lt.s32.totalorder %s22, 1
      %s362 = scalar_select %p361, %s22, 1
      %s363 = smul.addr %s362, 8
      %s364 = scalar_lea.vmem %s9, %s363
      %p365 = scmp.lt.s32.totalorder %s22, 1
      %s366 = scalar_select %p365, %s22, 1
      %s367 = smul.addr %s366, 8
      %s368 = scalar_lea.vmem %s10, %s367
      %v370 = vld [vmem:[%s360] sm:$0xf]
      %v371 = vld [vmem:[%s360 + $0x4] sm:$0xf]
      %v372 = vld [vmem:[%s360 + $0x8] sm:$0xf]
      %v373 = vld [vmem:[%s360 + $0xc] sm:$0x3]
      %v374 = vld [vmem:[%s1] sm:$0xf]
      %v375 = vld [vmem:[%s1 + $0x4] sm:$0xf]
      %v376 = vld [vmem:[%s1 + $0x8] sm:$0x3]
      %v381 = vunpack.c.l.b16 %v370
      %v382 = vunpack.c.l.b16 %v371
      %v383 = vunpack.c.l.b16 %v372
      %v384 = vunpack.c.l.b16 %v373
      %v385 = vpack.c.b16 %v382, %v381
      %v386 = vpack.c.b16 %v384, %v383
      %v390 = vunpack.c.l.b16 %v374
      %v391 = vunpack.c.l.b16 %v375
      %v392 = vunpack.c.l.b16 %v376
      %v393 = vpack.c.b16 %v391, %v390
      %v394 = vpack.c.b16 %v392, %v392
      %vm396 = vcmask 162816
      %v398 = vsel %vm396, %v385, 0
      %v401 = vsel %vm396, %v386, 0
      %vm403 = vcmask 1041408
      %v405 = vsel %vm403, %v394, 0
      %407 = vmatprep.subr.bf16.mxu0 0
      %408 = vmatpush1.bf16.msra.mxu0 0
      %409 = vmatprep.subr.bf16.mxu0 0
      %410 = vmatpush1.bf16.msra.mxu0 0
      %411 = vmatprep.subr.bf16.mxu0 0
      %412 = vmatpush1.bf16.msra.mxu0 0
      %413 = vmatprep.subr.bf16.mxu0 0
      %414 = vmatpush1.bf16.msra.mxu0 0
      %415 = vmatprep.subr.bf16.mxu0 0
      %416 = vmatpush1.bf16.msra.mxu0 0
      %417 = vmatprep.subr.bf16.mxu0 0
      %418 = vmatpush1.bf16.msra.mxu0 0
      %419 = vmatprep.subr.bf16.mxu0 0
      %420 = vmatpush1.bf16.msra.mxu0 %v405
      %421 = vmatprep.subr.bf16.mxu0 0
      %422 = vmatpush1.bf16.msra.mxu0 %v393
      %423 = vmatprep.subr.bf16.mxu0 0
      %424 = vmatpush2.bf16.msra.mxu0 0
      %425 = vmatprep.subr.bf16.mxu0 0
      %426 = vmatpush2.bf16.msra.mxu0 0
      %427 = vmatprep.subr.bf16.mxu0 0
      %428 = vmatpush2.bf16.msra.mxu0 0
      %429 = vmatprep.subr.bf16.mxu0 0
      %430 = vmatpush2.bf16.msra.mxu0 0
      %431 = vmatprep.subr.bf16.mxu0 0
      %432 = vmatpush2.bf16.msra.mxu0 0
      %433 = vmatprep.subr.bf16.mxu0 0
      %434 = vmatpush2.bf16.msra.mxu0 0
      %435 = vmatprep.subr.bf16.mxu0 0
      %436 = vmatpush2.bf16.msra.mxu0 0
      %437 = vmatprep.subr.bf16.mxu0 0
      %438 = vmatpush2.bf16.msra.mxu0 0
      %439 = vmatprep.mubr.bf16.mxu0 0
      %440 = vmatmul.mubr.bf16.gmra.mxu0 %v398
      %v441 = vpop.f32.mrf.mxu0
      %v442 = vadd.f32 0.0, %v441
      %v443 = vpop.f32.mrf.mxu0
      %v444 = vpop.f32.mrf.mxu0
      %v445 = vadd.f32 0.0, %v444
      %v446 = vpop.f32.mrf.mxu0
      %447 = vmatprep.mubr.bf16.mxu0 0
      %448 = vmatmul.mubr.bf16.gmra.mxu0 %v401
      %v449 = vpop.f32.mrf.mxu0
      %v450 = vadd.f32 0.0, %v449
      %v451 = vpop.f32.mrf.mxu0
      %v452 = vpop.f32.mrf.mxu0
      %v453 = vadd.f32 0.0, %v452
      %v454 = vpop.f32.mrf.mxu0
      %455 = vdwg.mxu0
      %v456 = vld [vmem:[%s2] sm:$0x1]
      %v458 = vlaneseq
      %v459 = vshrl.u32 %v458, 7
      %v460 = vsub.s32 0, %v459
      %v461 = vrot.slane %v456, %v460
      %v463 = vmul.f32 %v442, %v461
      %v464 = vmul.f32 %v445, %v461
      %v465 = vmul.f32 %v450, %v461
      %v466 = vmul.f32 %v453, %v461
      %v467 = vld [vmem:[%s3] sm:$0x1]
      %v469 = vlaneseq
      %v470 = vshrl.u32 %v469, 7
      %v471 = vsub.s32 0, %v470
      %v472 = vrot.slane %v467, %v471
      %v474 = vadd.f32 %v463, %v472
      %v475 = vadd.f32 %v464, %v472
      %v476 = vadd.f32 %v465, %v472
      %v477 = vadd.f32 %v466, %v472
      %v478 = vmax.f32 %v474, 0.0
      %v479 = vmax.f32 %v475, 0.0
      %v480 = vmax.f32 %v476, 0.0
      %v481 = vmax.f32 %v477, 0.0
      %v486 = vcombine.high %v478, %v478
      %v488 = vunpack.c.l.s4 1983009808
      %v489 = vunpack.c.0.s8 %v488
      %v490 = vlaneseq
      %v491 = vshrl.u32 %v490, 7
      %v492 = vsub.s32 %v489, %v491
      %v493 = vrot.slane %v478, %v492
      %v495 = vunpack.c.l.s4 1983009808
      %v496 = vunpack.c.0.s8 %v495
      %v497 = vlaneseq
      %v498 = vshrl.u32 %v497, 7
      %v499 = vsub.s32 %v496, %v498
      %v500 = vrot.slane %v486, %v499
      %v501 = vcombine.high %v493, %v493
      %v502 = vcombine.high %v500, %v500
      %v503 = vcombine.high %v479, %v479
      %v505 = vunpack.c.l.s4 1983009808
      %v506 = vunpack.c.0.s8 %v505
      %v507 = vlaneseq
      %v508 = vshrl.u32 %v507, 7
      %v509 = vsub.s32 %v506, %v508
      %v510 = vrot.slane %v479, %v509
      %v512 = vunpack.c.l.s4 1983009808
      %v513 = vunpack.c.0.s8 %v512
      %v514 = vlaneseq
      %v515 = vshrl.u32 %v514, 7
      %v516 = vsub.s32 %v513, %v515
      %v517 = vrot.slane %v503, %v516
      %v518 = vcombine.high %v510, %v510
      %v519 = vcombine.high %v517, %v517
      %v520 = vcombine.high %v480, %v480
      %v522 = vunpack.c.l.s4 1983009808
      %v523 = vunpack.c.0.s8 %v522
      %v524 = vlaneseq
      %v525 = vshrl.u32 %v524, 7
      %v526 = vsub.s32 %v523, %v525
      %v527 = vrot.slane %v480, %v526
      %v529 = vunpack.c.l.s4 1983009808
      %v530 = vunpack.c.0.s8 %v529
      %v531 = vlaneseq
      %v532 = vshrl.u32 %v531, 7
      %v533 = vsub.s32 %v530, %v532
      %v534 = vrot.slane %v520, %v533
      %v535 = vcombine.high %v527, %v527
      %v536 = vcombine.high %v534, %v534
      %v538 = vunpack.c.l.s4 1983009808
      %v539 = vunpack.c.0.s8 %v538
      %v540 = vlaneseq
      %v541 = vshrl.u32 %v540, 7
      %v542 = vsub.s32 %v539, %v541
      %v543 = vrot.slane %v481, %v542
      %v544 = vcombine.high %v543, %v543
      %v559 = vrot.slane %v493, 7
      %v560 = vrot.slane %v559, 2
      %v561 = vrot.slane %v501, 7
      %v562 = vrot.slane %v561, 2
      %v563 = vrot.slane %v500, 7
      %v564 = vrot.slane %v563, 2
      %v565 = vrot.slane %v502, 7
      %v566 = vrot.slane %v565, 2
      %v567 = vrot.slane %v510, 7
      %v568 = vrot.slane %v567, 2
      %v569 = vrot.slane %v518, 7
      %v570 = vrot.slane %v569, 2
      %v571 = vrot.slane %v517, 7
      %v572 = vrot.slane %v571, 2
      %v573 = vrot.slane %v519, 7
      %v574 = vrot.slane %v573, 2
      %v575 = vrot.slane %v527, 7
      %v576 = vrot.slane %v575, 2
      %v577 = vrot.slane %v535, 7
      %v578 = vrot.slane %v577, 2
      %v579 = vrot.slane %v534, 7
      %v580 = vrot.slane %v579, 2
      %v581 = vrot.slane %v536, 7
      %v582 = vrot.slane %v581, 2
      %v583 = vrot.slane %v543, 7
      %v584 = vrot.slane %v583, 2
      %v585 = vrot.slane %v544, 7
      %v586 = vrot.slane %v585, 2
      %v601 = vmax.f32 %v493, %v560
      %v602 = vmax.f32 %v501, %v562
      %v603 = vmax.f32 %v500, %v564
      %v604 = vmax.f32 %v502, %v566
      %v605 = vmax.f32 %v510, %v568
      %v606 = vmax.f32 %v518, %v570
      %v607 = vmax.f32 %v517, %v572
      %v608 = vmax.f32 %v519, %v574
      %v609 = vmax.f32 %v527, %v576
      %v610 = vmax.f32 %v535, %v578
      %v611 = vmax.f32 %v534, %v580
      %v612 = vmax.f32 %v536, %v582
      %v613 = vmax.f32 %v543, %v584
      %v614 = vmax.f32 %v544, %v586
      %v625 = vlaneseq
      %v626 = vshrl.u32 %v625, 7
      %v627 = vsub.s32 0, %v626
      %v628 = vrot.slane %v601, %v627
      %v629 = vlaneseq
      %v630 = vshrl.u32 %v629, 7
      %v631 = vsub.s32 0, %v630
      %v632 = vrot.slane %v602, %v631
      %v633 = vlaneseq
      %v634 = vshrl.u32 %v633, 7
      %v635 = vsub.s32 0, %v634
      %v636 = vrot.slane %v603, %v635
      %v637 = vlaneseq
      %v638 = vshrl.u32 %v637, 7
      %v639 = vsub.s32 0, %v638
      %v640 = vrot.slane %v604, %v639
      %v641 = vlaneseq
      %v642 = vshrl.u32 %v641, 7
      %v643 = vsub.s32 0, %v642
      %v644 = vrot.slane %v605, %v643
      %v645 = vlaneseq
      %v646 = vshrl.u32 %v645, 7
      %v647 = vsub.s32 0, %v646
      %v648 = vrot.slane %v606, %v647
      %v649 = vlaneseq
      %v650 = vshrl.u32 %v649, 7
      %v651 = vsub.s32 0, %v650
      %v652 = vrot.slane %v607, %v651
      %v653 = vlaneseq
      %v654 = vshrl.u32 %v653, 7
      %v655 = vsub.s32 0, %v654
      %v656 = vrot.slane %v608, %v655
      %v657 = vlaneseq
      %v658 = vshrl.u32 %v657, 7
      %v659 = vsub.s32 0, %v658
      %v660 = vrot.slane %v609, %v659
      %v661 = vlaneseq
      %v662 = vshrl.u32 %v661, 7
      %v663 = vsub.s32 0, %v662
      %v664 = vrot.slane %v610, %v663
      %vm665 = vcmask 1041409
      %v666 = vsel %vm665, %v632, %v628
      %vm667 = vcmask 1042434
      %v668 = vsel %vm667, %v636, %v666
      %vm669 = vcmask 1043459
      %v670 = vsel %vm669, %v640, %v668
      %vm671 = vcmask 1044484
      %v672 = vsel %vm671, %v644, %v670
      %vm673 = vcmask 1045509
      %v674 = vsel %vm673, %v648, %v672
      %vm675 = vcmask 1046534
      %v676 = vsel %vm675, %v652, %v674
      %vm677 = vcmask 1047559
      %v678 = vsel %vm677, %v656, %v676
      %v679 = vsel %vm665, %v664, %v660
      %v683 = vlaneseq
      %v684 = vshrl.u32 %v683, 7
      %v685 = vsub.s32 0, %v684
      %v686 = vrot.slane %v611, %v685
      %v687 = vsel %vm665, %v636, %v632
      %v688 = vsel %vm667, %v640, %v687
      %v689 = vsel %vm669, %v644, %v688
      %v690 = vsel %vm671, %v648, %v689
      %v691 = vsel %vm673, %v652, %v690
      %v692 = vsel %vm675, %v656, %v691
      %v693 = vsel %vm677, %v660, %v692
      %v694 = vsel %vm665, %v686, %v664
      %695 = vrot.lane.b32.xlu0 %v693, 32
      %v696 = vpop.permute.xlu0 %695
      %697 = vrot.lane.b32.xlu0 %v694, 32
      %v698 = vpop.permute.xlu0 %697
      %v702 = vlaneseq
      %v703 = vshrl.u32 %v702, 7
      %v704 = vsub.s32 0, %v703
      %v705 = vrot.slane %v612, %v704
      %v706 = vsel %vm665, %v640, %v636
      %v707 = vsel %vm667, %v644, %v706
      %v708 = vsel %vm669, %v648, %v707
      %v709 = vsel %vm671, %v652, %v708
      %v710 = vsel %vm673, %v656, %v709
      %v711 = vsel %vm675, %v660, %v710
      %v712 = vsel %vm677, %v664, %v711
      %v713 = vsel %vm665, %v705, %v686
      %714 = vrot.lane.b32.xlu0 %v712, 64
      %v715 = vpop.permute.xlu0 %714
      %716 = vrot.lane.b32.xlu0 %v713, 64
      %v717 = vpop.permute.xlu0 %716
      %v721 = vlaneseq
      %v722 = vshrl.u32 %v721, 7
      %v723 = vsub.s32 0, %v722
      %v724 = vrot.slane %v613, %v723
      %v725 = vsel %vm665, %v644, %v640
      %v726 = vsel %vm667, %v648, %v725
      %v727 = vsel %vm669, %v652, %v726
      %v728 = vsel %vm671, %v656, %v727
      %v729 = vsel %vm673, %v660, %v728
      %v730 = vsel %vm675, %v664, %v729
      %v731 = vsel %vm677, %v686, %v730
      %v732 = vsel %vm665, %v724, %v705
      %733 = vrot.lane.b32.xlu0 %v731, 96
      %v734 = vpop.permute.xlu0 %733
      %735 = vrot.lane.b32.xlu0 %v732, 96
      %v736 = vpop.permute.xlu0 %735
      %v740 = vlaneseq
      %v741 = vshrl.u32 %v740, 7
      %v742 = vsub.s32 0, %v741
      %v743 = vrot.slane %v614, %v742
      %v744 = vsel %vm665, %v648, %v644
      %v745 = vsel %vm667, %v652, %v744
      %v746 = vsel %vm669, %v656, %v745
      %v747 = vsel %vm671, %v660, %v746
      %v748 = vsel %vm673, %v664, %v747
      %v749 = vsel %vm675, %v686, %v748
      %v750 = vsel %vm677, %v705, %v749
      %v751 = vsel %vm665, %v743, %v724
      %vm754 = vcmask 261120
      %v755 = vsel %vm754, %v678, %v696
      %v756 = vsel %vm754, %v679, %v698
      %vm757 = vcmask 523264
      %v758 = vsel %vm757, %v755, %v715
      %v759 = vsel %vm757, %v756, %v717
      %vm760 = vcmask 785408
      %v761 = vsel %vm760, %v758, %v734
      %v762 = vsel %vm760, %v759, %v736
      %v763 = vpack.c.bf16 %v762, %v761
      %v764 = vpack.c.bf16 %v751, %v750
      %v765 = vld [vmem:[%s4] sm:$0xf]
      %v766 = vld [vmem:[%s4 + $0x4] sm:$0xf]
      %v767 = vld [vmem:[%s4 + $0x8] sm:$0xf]
      %v768 = vld [vmem:[%s4 + $0xc] sm:$0xf]
      %v769 = vld [vmem:[%s4 + $0x10] sm:$0xf]
      %v770 = vld [vmem:[%s4 + $0x14] sm:$0xf]
      %v771 = vld [vmem:[%s4 + $0x18] sm:$0xf]
      %v772 = vld [vmem:[%s4 + $0x1c] sm:$0xf]
      %v773 = vld [vmem:[%s4 + $0x20] sm:$0xf]
      %v774 = vld [vmem:[%s4 + $0x24] sm:$0xf]
      %v775 = vld [vmem:[%s4 + $0x28] sm:$0xf]
      %v776 = vld [vmem:[%s4 + $0x2c] sm:$0xf]
      %v777 = vld [vmem:[%s4 + $0x30] sm:$0xf]
      %v778 = vld [vmem:[%s4 + $0x34] sm:$0xf]
      %v779 = vld [vmem:[%s4 + $0x38] sm:$0xf]
      %v780 = vld [vmem:[%s4 + $0x3c] sm:$0xf]
      %v781 = vld [vmem:[%s4 + $0x40] sm:$0xf]
      %v782 = vld [vmem:[%s4 + $0x44] sm:$0xf]
      %v783 = vld [vmem:[%s4 + $0x48] sm:$0xf]
      %v784 = vld [vmem:[%s4 + $0x4c] sm:$0xf]
      %v805 = vunpack.c.l.b16 %v765
      %v806 = vunpack.c.l.b16 %v766
      %v807 = vunpack.c.l.b16 %v767
      %v808 = vunpack.c.l.b16 %v768
      %v809 = vunpack.c.l.b16 %v769
      %v810 = vunpack.c.l.b16 %v770
      %v811 = vunpack.c.l.b16 %v771
      %v812 = vunpack.c.l.b16 %v772
      %v813 = vunpack.c.l.b16 %v773
      %v814 = vunpack.c.l.b16 %v774
      %v815 = vunpack.c.l.b16 %v775
      %v816 = vunpack.c.l.b16 %v776
      %v817 = vunpack.c.l.b16 %v777
      %v818 = vunpack.c.l.b16 %v778
      %v819 = vunpack.c.l.b16 %v779
      %v820 = vunpack.c.l.b16 %v780
      %v821 = vunpack.c.l.b16 %v781
      %v822 = vunpack.c.l.b16 %v782
      %v823 = vunpack.c.l.b16 %v783
      %v824 = vunpack.c.l.b16 %v784
      %v825 = vpack.c.b16 %v806, %v805
      %v826 = vpack.c.b16 %v808, %v807
      %v827 = vpack.c.b16 %v810, %v809
      %v828 = vpack.c.b16 %v812, %v811
      %v829 = vpack.c.b16 %v814, %v813
      %v830 = vpack.c.b16 %v816, %v815
      %v831 = vpack.c.b16 %v818, %v817
      %v832 = vpack.c.b16 %v820, %v819
      %v833 = vpack.c.b16 %v822, %v821
      %v834 = vpack.c.b16 %v824, %v823
      %v846 = vsel %vm754, %v764, 0
      %848 = vmatprep.subr.bf16.mxu0 0
      %849 = vmatpush1.bf16.msra.mxu0 %v832
      %850 = vmatprep.subr.bf16.mxu0 0
      %851 = vmatpush1.bf16.msra.mxu0 %v831
      %852 = vmatprep.subr.bf16.mxu0 0
      %853 = vmatpush1.bf16.msra.mxu0 %v830
      %854 = vmatprep.subr.bf16.mxu0 0
      %855 = vmatpush1.bf16.msra.mxu0 %v829
      %856 = vmatprep.subr.bf16.mxu0 0
      %857 = vmatpush1.bf16.msra.mxu0 %v828
      %858 = vmatprep.subr.bf16.mxu0 0
      %859 = vmatpush1.bf16.msra.mxu0 %v827
      %860 = vmatprep.subr.bf16.mxu0 0
      %861 = vmatpush1.bf16.msra.mxu0 %v826
      %862 = vmatprep.subr.bf16.mxu0 0
      %863 = vmatpush1.bf16.msra.mxu0 %v825
      %864 = vmatprep.subr.bf16.mxu0 0
      %865 = vmatpush2.bf16.msra.mxu0 0
      %866 = vmatprep.subr.bf16.mxu0 0
      %867 = vmatpush2.bf16.msra.mxu0 0
      %868 = vmatprep.subr.bf16.mxu0 0
      %869 = vmatpush2.bf16.msra.mxu0 0
      %870 = vmatprep.subr.bf16.mxu0 0
      %871 = vmatpush2.bf16.msra.mxu0 0
      %872 = vmatprep.subr.bf16.mxu0 0
      %873 = vmatpush2.bf16.msra.mxu0 0
      %874 = vmatprep.subr.bf16.mxu0 0
      %875 = vmatpush2.bf16.msra.mxu0 0
      %876 = vmatprep.subr.bf16.mxu0 0
      %877 = vmatpush2.bf16.msra.mxu0 %v834
      %878 = vmatprep.subr.bf16.mxu0 0
      %879 = vmatpush2.bf16.msra.mxu0 %v833
      %880 = vmatprep.mubr.bf16.mxu0 %v846
      %881 = vmatmul.mubr.bf16.gmra.mxu0 %v763
      %v882 = vpop.f32.mrf.mxu0
      %v883 = vadd.f32 0.0, %v882
      %v884 = vpop.f32.mrf.mxu0
      %v885 = vpop.f32.mrf.mxu0
      %v886 = vadd.f32 0.0, %v885
      %v887 = vpop.f32.mrf.mxu0
      %888 = vdwg.mxu0
      %v889 = vld [vmem:[%s5] sm:$0x1]
      %v891 = vlaneseq
      %v892 = vshrl.u32 %v891, 7
      %v893 = vsub.s32 0, %v892
      %v894 = vrot.slane %v889, %v893
      %v896 = vmul.f32 %v883, %v894
      %v897 = vmul.f32 %v886, %v894
      %v898 = vld [vmem:[%s6] sm:$0x1]
      %v900 = vlaneseq
      %v901 = vshrl.u32 %v900, 7
      %v902 = vsub.s32 0, %v901
      %v903 = vrot.slane %v898, %v902
      %v905 = vadd.f32 %v896, %v903
      %v906 = vadd.f32 %v897, %v903
      %v907 = vmax.f32 %v905, 0.0
      %v908 = vmax.f32 %v906, 0.0
      %v911 = vcombine.high %v907, %v907
      %v913 = vunpack.c.l.s4 1983009808
      %v914 = vunpack.c.0.s8 %v913
      %v915 = vlaneseq
      %v916 = vshrl.u32 %v915, 7
      %v917 = vsub.s32 %v914, %v916
      %v918 = vrot.slane %v907, %v917
      %v920 = vunpack.c.l.s4 1983009808
      %v921 = vunpack.c.0.s8 %v920
      %v922 = vlaneseq
      %v923 = vshrl.u32 %v922, 7
      %v924 = vsub.s32 %v921, %v923
      %v925 = vrot.slane %v911, %v924
      %v926 = vcombine.high %v918, %v918
      %v927 = vcombine.high %v925, %v925
      %v929 = vunpack.c.l.s4 1983009808
      %v930 = vunpack.c.0.s8 %v929
      %v931 = vlaneseq
      %v932 = vshrl.u32 %v931, 7
      %v933 = vsub.s32 %v930, %v932
      %v934 = vrot.slane %v908, %v933
      %v940 = vrot.slane %v918, 7
      %v941 = vrot.slane %v940, 2
      %v942 = vrot.slane %v926, 7
      %v943 = vrot.slane %v942, 2
      %v944 = vrot.slane %v925, 7
      %v945 = vrot.slane %v944, 2
      %v946 = vrot.slane %v927, 7
      %v947 = vrot.slane %v946, 2
      %v948 = vrot.slane %v934, 7
      %v949 = vrot.slane %v948, 2
      %v955 = vmax.f32 %v918, %v941
      %v956 = vmax.f32 %v926, %v943
      %v957 = vmax.f32 %v925, %v945
      %v958 = vmax.f32 %v927, %v947
      %v959 = vmax.f32 %v934, %v949
      %v960 = vpack.c.bf16 %v955, %v955
      %v961 = vpack.c.bf16 %v956, %v956
      %v962 = vpack.c.bf16 %v957, %v957
      %v963 = vpack.c.bf16 %v958, %v958
      %v964 = vpack.c.bf16 %v959, %v959
      %v965 = vld [vmem:[%s7] sm:$0xf]
      %v966 = vld [vmem:[%s7 + $0x4] sm:$0xf]
      %v967 = vld [vmem:[%s7 + $0x8] sm:$0xf]
      %v968 = vld [vmem:[%s7 + $0xc] sm:$0xf]
      %v969 = vld [vmem:[%s8] sm:$0x1]
      %v971 = vlaneseq
      %v972 = vshrl.u32 %v971, 7
      %v973 = vsub.s32 0, %v972
      %v974 = vrot.slane %v969, %v973
      %v981 = vunpack.c.l.b16 %v960
      %v982 = vunpack.c.l.b16 %v961
      %v983 = vunpack.c.l.b16 %v962
      %v984 = vunpack.c.l.b16 %v963
      %v985 = vunpack.c.l.b16 %v964
      %v986 = vrot.slane %v982, 7
      %v987 = vsel %vm665, %v986, %v981
      %v988 = vrot.slane %v983, 6
      %v989 = vsel %vm667, %v988, %v987
      %v990 = vrot.slane %v984, 5
      %v991 = vsel %vm669, %v990, %v989
      %v992 = vrot.slane %v985, 4
      %v993 = vsel %vm671, %v992, %v991
      %v994 = vpack.c.b16 %v993, %v993
      %v999 = vunpack.c.l.b16 %v965
      %v1000 = vunpack.c.l.b16 %v966
      %v1001 = vunpack.c.l.b16 %v967
      %v1002 = vunpack.c.l.b16 %v968
      %v1003 = vpack.c.b16 %v1000, %v999
      %v1004 = vpack.c.b16 %v1002, %v1001
      %v1008 = vsel %vm754, %v994, 0
      %1010 = vmatprep.subr.bf16.mxu0 0
      %1011 = vmatpush1.bf16.msra.mxu0 0
      %1012 = vmatprep.subr.bf16.mxu0 0
      %1013 = vmatpush1.bf16.msra.mxu0 0
      %1014 = vmatprep.subr.bf16.mxu0 0
      %1015 = vmatpush1.bf16.msra.mxu0 0
      %1016 = vmatprep.subr.bf16.mxu0 0
      %1017 = vmatpush1.bf16.msra.mxu0 0
      %1018 = vmatprep.subr.bf16.mxu0 0
      %1019 = vmatpush1.bf16.msra.mxu0 0
      %1020 = vmatprep.subr.bf16.mxu0 0
      %1021 = vmatpush1.bf16.msra.mxu0 0
      %1022 = vmatprep.subr.bf16.mxu0 0
      %1023 = vmatpush1.bf16.msra.mxu0 %v1004
      %1024 = vmatprep.subr.bf16.mxu0 0
      %1025 = vmatpush1.bf16.msra.mxu0 %v1003
      %1026 = vmatprep.subr.bf16.mxu0 0
      %1027 = vmatpush2.bf16.msra.mxu0 0
      %1028 = vmatprep.subr.bf16.mxu0 0
      %1029 = vmatpush2.bf16.msra.mxu0 0
      %1030 = vmatprep.subr.bf16.mxu0 0
      %1031 = vmatpush2.bf16.msra.mxu0 0
      %1032 = vmatprep.subr.bf16.mxu0 0
      %1033 = vmatpush2.bf16.msra.mxu0 0
      %1034 = vmatprep.subr.bf16.mxu0 0
      %1035 = vmatpush2.bf16.msra.mxu0 0
      %1036 = vmatprep.subr.bf16.mxu0 0
      %1037 = vmatpush2.bf16.msra.mxu0 0
      %1038 = vmatprep.subr.bf16.mxu0 0
      %1039 = vmatpush2.bf16.msra.mxu0 0
      %1040 = vmatprep.subr.bf16.mxu0 0
      %1041 = vmatpush2.bf16.msra.mxu0 0
      %1042 = vmatprep.mubr.bf16.mxu0 0
      %1043 = vmatmul.mubr.bf16.gmra.mxu0 %v1008
      %v1044 = vpop.f32.mrf.mxu0
      %v1045 = vadd.f32 %v974, %v1044
      %v1046 = vpop.f32.mrf.mxu0
      %v1047 = vpop.f32.mrf.mxu0
      %v1048 = vpop.f32.mrf.mxu0
      %1049 = vdwg.mxu0
      %v1055 = vlaneseq
      %v1056 = vshrl.u32 %v1055, 7
      %v1057 = vsub.s32 0, %v1056
      %v1058 = vrot.slane %v955, %v1057
      %v1059 = vlaneseq
      %v1060 = vshrl.u32 %v1059, 7
      %v1061 = vsub.s32 0, %v1060
      %v1062 = vrot.slane %v956, %v1061
      %v1063 = vlaneseq
      %v1064 = vshrl.u32 %v1063, 7
      %v1065 = vsub.s32 0, %v1064
      %v1066 = vrot.slane %v957, %v1065
      %v1067 = vlaneseq
      %v1068 = vshrl.u32 %v1067, 7
      %v1069 = vsub.s32 0, %v1068
      %v1070 = vrot.slane %v958, %v1069
      %v1071 = vlaneseq
      %v1072 = vshrl.u32 %v1071, 7
      %v1073 = vsub.s32 0, %v1072
      %v1074 = vrot.slane %v959, %v1073
      %v1075 = vsel %vm665, %v1062, %v1058
      %v1076 = vsel %vm667, %v1066, %v1075
      %v1077 = vsel %vm669, %v1070, %v1076
      %v1078 = vsel %vm671, %v1074, %v1077
      %vm1080 = vcmask 258048
      %1081 = vst.msk [vmem:[%s364] sm:$0x1f] %vm1080, %v1078
      %1082 = vst [vmem:[%s368] sm:$0x1f] %v1045
      %p1083 = scmp.lt.s32.totalorder %s22, 1
      %s1084 = scalar_select %p1083, %s22, 1
      %s1085 = smul.addr %s1084, 8
      %s1086 = scalar_lea.vmem %s9, %s1085
      %p1087 = scmp.lt.s32.totalorder %s22, 1
      %s1088 = scalar_select %p1087, %s22, 1
      %s1089 = smul.addr %s1088, 8
      %s1090 = scalar_lea.vmem %s10, %s1089
      // Predicated region
      $region57: #{tpu_custom_call.1} parent=55 // pred_check
        %p1091 = pneg %p234
      $region58: #{tpu_custom_call.1} parent=55 // pred_check_branch
        %1093 = sbr.rel (%p1091) target = $region60
      $region59: #{tpu_custom_call.1} parent=55 // pred_region
        _
      $region60: #{tpu_custom_call.1} parent=55 // pred_fallthru
        _
      // Predicated region
      $region61: #{tpu_custom_call.1} parent=55 // pred_check
        %p1094 = pneg %p260
      $region62: #{tpu_custom_call.1} parent=55 // pred_check_branch
        %1096 = sbr.rel (%p1094) target = $region64
      $region63: #{tpu_custom_call.1} parent=55 // pred_region
        _
      $region64: #{tpu_custom_call.1} parent=55 // pred_fallthru
        _
    $region56: #{tpu_custom_call.1} parent=5 // pred_fallthru
      _
    %p1097 = scmp.le.s32.totalorder 2, %s17
    // Predicated region
    $region65: #{tpu_custom_call.1} parent=5 // pred_check
      %p1098 = pneg %p1097
    $region66: #{tpu_custom_call.1} parent=5 // pred_check_branch
      %1100 = sbr.rel (%p1098) target = $region68
    $region67: #{tpu_custom_call.1} parent=5 // pred_region
      %s1101 = ssub.s32 %s17, 2
      // Predicated region
      $region69: #{tpu_custom_call.1} parent=67 // pred_check
        %p1102 = pneg %p240
      $region70: #{tpu_custom_call.1} parent=67 // pred_check_branch
        %1104 = sbr.rel (%p1102) target = $region72
      $region71: #{tpu_custom_call.1} parent=67 // pred_region
        %p1105 = scmp.lt.s32.totalorder %s23, 1
        %s1106 = scalar_select %p1105, %s23, 1
        %s1107 = smul.addr %s1106, 8
        %s1108 = scalar_lea.vmem %s9, %s1107
      $region72: #{tpu_custom_call.1} parent=67 // pred_fallthru
        _
      // Predicated region
      $region73: #{tpu_custom_call.1} parent=67 // pred_check
        %p1109 = pneg %p266
      $region74: #{tpu_custom_call.1} parent=67 // pred_check_branch
        %1111 = sbr.rel (%p1109) target = $region76
      $region75: #{tpu_custom_call.1} parent=67 // pred_region
        %p1112 = scmp.lt.s32.totalorder %s23, 1
        %s1113 = scalar_select %p1112, %s23, 1
        %s1114 = smul.addr %s1113, 8
        %s1115 = scalar_lea.vmem %s10, %s1114
      $region76: #{tpu_custom_call.1} parent=67 // pred_fallthru
        _
    $region68: #{tpu_custom_call.1} parent=5 // pred_fallthru
      _
  $region6: #{tpu_custom_call.1} parent=0 // loop_footer
    %s21 = sadd.s32 1, %s17
  $region7: #{tpu_custom_call.1} parent=0 // loop_footer_branch
    %16 = sbr.rel target = $region3
  $region8: #{tpu_custom_call.1} parent=0 // loop_exit
    _

</llo_original>
